<compile_context>
chip_gen: v7x
topology: tpu7x:2x2x1
jax: 0.10.0
libtpu: 0.0.40
codegen_flags: <defaults>
</compile_context>

<pallas_src>
import functools

import jax
import jax.numpy as jnp
from jax.experimental import pallas as pl
from jax.experimental.pallas import tpu as pltpu


def _ru128(n: int) -> int:
    return ((n + 127) // 128) * 128


# Packing order inside the weight/bias slabs.  Consecutive runs share a matmul LHS:
#   state-LHS (emb row 0, hid row 1): attn_We, comb_We, attn_Wh, W_hr, W_hz, W_hn
#   x-LHS (GRU input gates)        : W_ir, W_iz, W_in
#   attn_applied-LHS               : comb_Wa
#   h_new-LHS                      : out_W
_BLOCKS = (
    ("attn_We", "attn_b"),
    ("comb_We", "comb_b"),
    ("attn_Wh", None),
    ("W_hr", "b_hr"),
    ("W_hz", "b_hz"),
    ("W_hn", "b_hn"),
    ("W_ir", "b_ir"),
    ("W_iz", "b_iz"),
    ("W_in", "b_in"),
    ("comb_Wa", None),
    ("out_W", "out_b"),
)


def build_layout(H, L, V):
    widths = {
        "attn_We": L, "comb_We": H, "attn_Wh": L,
        "W_hr": H, "W_hz": H, "W_hn": H,
        "W_ir": H, "W_iz": H, "W_in": H,
        "comb_Wa": H, "out_W": V,
    }
    lay = {"H": H, "L": L, "V": V, "widths": widths}
    off = 0
    for wname, _ in _BLOCKS:
        lay[wname] = off
        off += _ru128(widths[wname])
    lay["total"] = off
    # fused-matmul segment boundaries (blocks sharing an LHS)
    lay["sh_lo"], lay["sh_hi"] = lay["attn_We"], lay["W_ir"]   # merged (emb,hid) state segment
    lay["x_lo"], lay["x_hi"] = lay["W_ir"], lay["comb_Wa"]
    lay["a_lo"], lay["a_hi"] = lay["comb_Wa"], lay["out_W"]
    lay["o_lo"], lay["o_hi"] = lay["out_W"], lay["total"]
    # packed output layout: [log_probs | h_new | attn_weights], 128-aligned sub-blocks
    lay["out_h"] = _ru128(V)
    lay["out_a"] = _ru128(V) + _ru128(H)
    lay["out_total"] = _ru128(V) + _ru128(H) + _ru128(L)
    return lay


def pack_params(params, lay):
    """Pack all weights into one (H, total) bf16 slab and all biases into one (1, total) f32 slab."""
    H, total = lay["H"], lay["total"]
    w_slab = jnp.zeros((H, total), jnp.float32)
    b_slab = jnp.zeros((1, total), jnp.float32)
    for wname, bname in _BLOCKS:
        off, wdt = lay[wname], lay["widths"][wname]
        w_slab = w_slab.at[:, off:off + wdt].set(params[wname])
        if bname is not None:
            b_slab = b_slab.at[:, off:off + wdt].set(params[bname])
    return w_slab.astype(jnp.bfloat16), b_slab


def attn_decoder_kernel(emb_ref, h0_ref, enc_ref, w_ref, b_ref, out_ref, h_scr, *, lay):
    H, L, V = lay["H"], lay["L"], lay["V"]
    f32, bf16 = jnp.float32, jnp.bfloat16
    t = pl.program_id(0)

    @pl.when(t == 0)
    def _():
        h_scr[...] = h0_ref[...]                 # initialize carried hidden state

    emb = emb_ref[pl.ds(t, 1), :]                # (1, H) embedded token (dropout=identity, eval)
    hid = h_scr[...]                             # (1, H) previous hidden state

    # ---- merged (emb,hid) MXU push over [attn_We|comb_We|attn_Wh|W_hr|W_hz|W_hn] ----
    sh_lo, sh_hi = lay["sh_lo"], lay["sh_hi"]
    lhs2 = jnp.concatenate([emb, hid], axis=0).astype(bf16)             # (2, H) bf16 LHS
    y = jnp.dot(lhs2, w_ref[:, sh_lo:sh_hi],
                preferred_element_type=f32) + b_ref[:, sh_lo:sh_hi]     # (2, seg) f32

    def seg(row, name, width):
        off = lay[name] - sh_lo
        return y[row:row + 1, off:off + width]

    attn_e = seg(0, "attn_We", L)    # includes attn_b
    comb_e = seg(0, "comb_We", H)    # includes comb_b
    attn_h = seg(1, "attn_Wh", L)
    gh_r = seg(1, "W_hr", H)         # includes b_hr
    gh_z = seg(1, "W_hz", H)         # includes b_hz
    gh_n = seg(1, "W_hn", H)         # includes b_hn

    # ---- attention weights: softmax over L encoder positions (exact reciprocal) ----
    attn_logits = attn_e + attn_h
    m = jnp.max(attn_logits, axis=-1, keepdims=True)
    e = jnp.exp(attn_logits - m)
    attn_w = e / jnp.sum(e, axis=-1, keepdims=True)

    # ---- attn_applied = attn_weights @ encoder_outputs (bf16 MXU, f32 acc) ----
    attn_applied = jnp.dot(attn_w.astype(bf16), enc_ref[...],
                           preferred_element_type=f32)                  # (1, H)

    # ---- attn_combine(cat(emb, attn_applied)) then ReLU ----
    y_a = jnp.dot(attn_applied.astype(bf16), w_ref[:, lay["a_lo"]:lay["a_hi"]],
                  preferred_element_type=f32)
    x = jnp.maximum(comb_e + y_a[:, 0:H], 0.0)                          # comb_b already in comb_e

    # ---- GRU input gates fused matmul: [W_ir | W_iz | W_in] ----
    y_x = jnp.dot(x.astype(bf16), w_ref[:, lay["x_lo"]:lay["x_hi"]],
                  preferred_element_type=f32) + b_ref[:, lay["x_lo"]:lay["x_hi"]]
    xb = lay["x_lo"]
    gi_r = y_x[:, lay["W_ir"] - xb: lay["W_ir"] - xb + H]
    gi_z = y_x[:, lay["W_iz"] - xb: lay["W_iz"] - xb + H]
    gi_n = y_x[:, lay["W_in"] - xb: lay["W_in"] - xb + H]

    # ---- single GRU step (PyTorch nn.GRU gate math), f32 elementwise ----
    r = jax.nn.sigmoid(gi_r + gh_r)
    z = jax.nn.sigmoid(gi_z + gh_z)
    n = jnp.tanh(gi_n + r * gh_n)                                       # b_hn already in gh_n
    h_new = (1.0 - z) * n + z * hid
    h_scr[...] = h_new                                                  # carry to next step

    # ---- output projection + log_softmax ----
    y_o = jnp.dot(h_new.astype(bf16), w_ref[:, lay["o_lo"]:lay["o_hi"]],
                  preferred_element_type=f32) + b_ref[:, lay["o_lo"]:lay["o_hi"]]
    logits = y_o[:, 0:V]
    lm = jnp.max(logits, axis=-1, keepdims=True)
    shifted = logits - lm
    logp = shifted - jnp.log(jnp.sum(jnp.exp(shifted), axis=-1, keepdims=True))

    # ---- single lane-dense packed row store: [log_probs | h_new | attn_weights] ----
    def zeros(nlanes):
        return jnp.zeros((1, nlanes), f32)

    packed = jnp.concatenate(
        [logp, zeros(lay["out_h"] - V),
         h_new, zeros(lay["out_a"] - lay["out_h"] - H),
         attn_w, zeros(lay["out_total"] - lay["out_a"] - L)], axis=1)
    out_ref[pl.ds(t, 1), :] = packed


def attn_decoder_forward(embedded_seq, hidden, encoder_outputs, w_slab, b_slab, lay):
    """Run T teacher-forced decode steps in one kernel call.

    Returns (log_probs (T,V), hiddens (T,H), attn_weights (T,L)); hiddens[t] is the GRU
    state after step t (hiddens[-1] is the module's returned hidden for the last step).
    """
    H, L, V = lay["H"], lay["L"], lay["V"]
    T = embedded_seq.shape[0]
    h0 = hidden.reshape(1, H)
    enc_bf16 = encoder_outputs.astype(jnp.bfloat16)

    def res(shape):  # resident block: same block every grid step -> single DMA
        return pl.BlockSpec(shape, lambda t: (0, 0))

    per_step_flops = (2 * H * (2 * (lay["sh_hi"] - lay["sh_lo"])
                               + (lay["total"] - lay["sh_hi"])) + 2 * L * H)
    bytes_accessed = int(embedded_seq.size * 4 + h0.size * 4 + enc_bf16.size * 2
                         + w_slab.size * 2 + b_slab.size * 4 + T * lay["out_total"] * 4)

    out = pl.pallas_call(
        functools.partial(attn_decoder_kernel, lay=lay),
        out_shape=jax.ShapeDtypeStruct((T, lay["out_total"]), jnp.float32),
        grid_spec=pltpu.PrefetchScalarGridSpec(
            num_scalar_prefetch=0,
            grid=(T,),
            in_specs=[
                res((T, H)),                 # embedded tokens for all steps
                res((1, H)),                 # initial hidden
                res((L, H)),                 # encoder outputs (bf16)
                res((H, lay["total"])),      # packed weights (bf16)
                res((1, lay["total"])),      # packed biases (f32)
            ],
            out_specs=res((T, lay["out_total"])),
            scratch_shapes=[pltpu.VMEM((1, H), jnp.float32)],   # carried hidden state
        ),
        compiler_params=pltpu.CompilerParams(dimension_semantics=("arbitrary",)),
        cost_estimate=pl.CostEstimate(flops=T * per_step_flops,
                                      transcendentals=T * (L + V + 3 * H + 2),
                                      bytes_accessed=bytes_accessed),
    )(embedded_seq, h0, enc_bf16, w_slab, b_slab)

    log_probs = out[:, 0:V]
    hiddens = out[:, lay["out_h"]:lay["out_h"] + H]
    attn_weights = out[:, lay["out_a"]:lay["out_a"] + L]
    return log_probs, hiddens, attn_weights


def make_params(key, hidden_size, output_size, max_length):
    """Deterministic synthetic parameters, stored as (in, out) so the kernel computes x @ W + b."""
    H, V, L = hidden_size, output_size, max_length
    keys = jax.random.split(key, 24)
    k = iter(keys)

    def w(shape, scale=0.1):
        return (scale * jax.random.normal(next(k), shape)).astype(jnp.float32)

    params = dict(
        embedding=w((V, H)),
        attn_We=w((H, L)), attn_Wh=w((H, L)), attn_b=w((1, L)),
        comb_We=w((H, H)), comb_Wa=w((H, H)), comb_b=w((1, H)),
        W_ir=w((H, H)), W_iz=w((H, H)), W_in=w((H, H)),
        W_hr=w((H, H)), W_hz=w((H, H)), W_hn=w((H, H)),
        b_ir=w((1, H)), b_iz=w((1, H)), b_in=w((1, H)),
        b_hr=w((1, H)), b_hz=w((1, H)), b_hn=w((1, H)),
        out_W=w((H, V)), out_b=w((1, V)),
    )
    # Round weight matrices to bf16-representable values so the kernel's bf16 slab and the
    # f32 reference use bit-identical weights (biases stay full f32).
    for wname, _ in _BLOCKS:
        params[wname] = params[wname].astype(jnp.bfloat16).astype(jnp.float32)
    return params


def reference_forward(emb, hidden, encoder_outputs, p):
    """Pure-JAX (f32) reference of one decoder step — same math as the PyTorch module."""
    hid = hidden.reshape(1, -1)
    attn_logits = emb @ p["attn_We"] + hid @ p["attn_Wh"] + p["attn_b"]
    attn_w = jax.nn.softmax(attn_logits, axis=-1)
    attn_applied = attn_w @ encoder_outputs
    x = jax.nn.relu(emb @ p["comb_We"] + attn_applied @ p["comb_Wa"] + p["comb_b"])
    r = jax.nn.sigmoid(x @ p["W_ir"] + p["b_ir"] + hid @ p["W_hr"] + p["b_hr"])
    z = jax.nn.sigmoid(x @ p["W_iz"] + p["b_iz"] + hid @ p["W_hz"] + p["b_hz"])
    n = jnp.tanh(x @ p["W_in"] + p["b_in"] + r * (hid @ p["W_hn"] + p["b_hn"]))
    h_new = (1.0 - z) * n + z * hid
    logits = h_new @ p["out_W"] + p["out_b"]
    return jax.nn.log_softmax(logits, axis=-1), h_new.reshape(1, 1, -1), attn_w


if __name__ == "__main__":
    HIDDEN = 32
    OUTPUT = 40      # vocabulary size
    MAX_LEN = 80
    T = 6            # teacher-forced decode steps executed inside ONE kernel call

    key = jax.random.PRNGKey(0)
    pkey, ekey, tkey = jax.random.split(key, 3)
    params = make_params(pkey, HIDDEN, OUTPUT, MAX_LEN)

    lay = build_layout(HIDDEN, MAX_LEN, OUTPUT)
    w_slab, b_slab = pack_params(params, lay)

    # Inputs: token ids (teacher forcing), initial hidden state, encoder outputs.
    token_ids = jax.random.randint(tkey, (T,), 0, OUTPUT, dtype=jnp.int32)
    hidden0 = jnp.zeros((1, 1, HIDDEN), dtype=jnp.float32)              # initHidden()
    encoder_outputs = 0.1 * jax.random.normal(ekey, (MAX_LEN, HIDDEN))
    # bf16-representable so kernel (bf16 copy) and f32 reference see identical values.
    encoder_outputs = encoder_outputs.astype(jnp.bfloat16).astype(jnp.float32)

    # Embedding lookup + view(1,1,-1) + dropout(eval=identity) is glue -> plain JAX.
    embedded_seq = params["embedding"][token_ids]                        # (T, H)

    log_probs, hiddens, attn_weights = attn_decoder_forward(
        embedded_seq, hidden0, encoder_outputs, w_slab, b_slab, lay)
    jax.block_until_ready((log_probs, hiddens, attn_weights))

    # Reference: run the module's single-step forward T times in plain JAX f32.
    h = hidden0.reshape(1, HIDDEN)
    ref_lp, ref_h, ref_aw = [], [], []
    for t in range(T):
        lp, h3, aw = reference_forward(embedded_seq[t:t + 1], h, encoder_outputs, params)
        h = h3.reshape(1, HIDDEN)
        ref_lp.append(lp)
        ref_h.append(h)
        ref_aw.append(aw)
    ref_lp = jnp.concatenate(ref_lp, axis=0)
    ref_h = jnp.concatenate(ref_h, axis=0)
    ref_aw = jnp.concatenate(ref_aw, axis=0)

    # bf16 LHS activations on the MXU (f32 accumulation) -> small rounding vs. the f32 reference.
    assert jnp.allclose(log_probs, ref_lp, atol=1e-2), "log_probs mismatch"
    assert jnp.allclose(hiddens, ref_h, atol=1e-2), "hidden mismatch"
    assert jnp.allclose(attn_weights, ref_aw, atol=1e-2), "attn_weights mismatch"

    new_hidden = hiddens[-1].reshape(1, 1, HIDDEN)                       # module-style hidden
    assert log_probs.shape == (T, OUTPUT)
    assert new_hidden.shape == (1, 1, HIDDEN)
    assert attn_weights.shape == (T, MAX_LEN)

    print("KERNEL_OK")
</pallas_src>

<mosaic_0001>
module attributes {stable_mosaic.version = 11 : i64} {
  func.func @attn_decoder_kernel(%arg0: i32, %arg1: memref<6x32xf32, #tpu.memory_space<vmem>>, %arg2: memref<1x32xf32, #tpu.memory_space<vmem>>, %arg3: memref<80x32xbf16, #tpu.memory_space<vmem>>, %arg4: memref<32x1408xbf16, #tpu.memory_space<vmem>>, %arg5: memref<1x1408xf32, #tpu.memory_space<vmem>>, %arg6: memref<6x384xf32, #tpu.memory_space<vmem>>, %arg7: memref<1x32xf32, #tpu.memory_space<vmem>>) attributes {dimension_semantics = [#tpu.dimension_semantics<arbitrary>], iteration_bounds = array<i64: 6>, scalar_prefetch = 0 : i64, scratch_operands = 1 : i64, tpu.core_type = #tpu.core_type<tc>, window_params = [{pipeline_mode = #tpu.pipeline_mode<synchronous>, transform_indices = @transform_0, window_bounds = array<i64: 6, 32>}, {pipeline_mode = #tpu.pipeline_mode<synchronous>, transform_indices = @transform_1, window_bounds = array<i64: 1, 32>}, {pipeline_mode = #tpu.pipeline_mode<synchronous>, transform_indices = @transform_2, window_bounds = array<i64: 80, 32>}, {pipeline_mode = #tpu.pipeline_mode<synchronous>, transform_indices = @transform_3, window_bounds = array<i64: 32, 1408>}, {pipeline_mode = #tpu.pipeline_mode<synchronous>, transform_indices = @transform_4, window_bounds = array<i64: 1, 1408>}, {pipeline_mode = #tpu.pipeline_mode<synchronous>, transform_indices = @transform_5, window_bounds = array<i64: 6, 384>}]} {
    %c0_i32 = arith.constant 0 : i32
    %0 = arith.cmpi eq, %arg0, %c0_i32 : i32
    %1 = arith.extui %0 : i1 to i32
    %c0_i32_0 = arith.constant 0 : i32
    %2 = arith.cmpi ne, %1, %c0_i32_0 : i32
    scf.if %2 {
      %c0_34 = arith.constant 0 : index
      %c0_35 = arith.constant 0 : index
      %90 = vector.load %arg2[%c0_34, %c0_35] : memref<1x32xf32, #tpu.memory_space<vmem>>, vector<1x32xf32>
      %c0_36 = arith.constant 0 : index
      %c0_37 = arith.constant 0 : index
      %91 = vector.load %arg7[%c0_36, %c0_37] : memref<1x32xf32, #tpu.memory_space<vmem>>, vector<1x32xf32>
      tpu.vector_store %arg7[%c0_36, %c0_37], %90 {strides = array<i32>} : memref<1x32xf32, #tpu.memory_space<vmem>>, vector<1x32xf32>,
    } else {
    }
    %3 = arith.index_cast %arg0 : i32 to index
    %c0 = arith.constant 0 : index
    %4 = vector.load %arg1[%3, %c0] : memref<6x32xf32, #tpu.memory_space<vmem>>, vector<1x32xf32>
    %c0_1 = arith.constant 0 : index
    %c0_2 = arith.constant 0 : index
    %5 = vector.load %arg7[%c0_1, %c0_2] : memref<1x32xf32, #tpu.memory_space<vmem>>, vector<1x32xf32>
    %6 = tpu.concatenate %4, %5 in 0 : vector<1x32xf32>, vector<1x32xf32> -> vector<2x32xf32>
    %7 = arith.truncf %6 : vector<2x32xf32> to vector<2x32xbf16>
    %c0_3 = arith.constant 0 : index
    %c0_4 = arith.constant 0 : index
    %8 = vector.load %arg4[%c0_3, %c0_4] : memref<32x1408xbf16, #tpu.memory_space<vmem>>, vector<32x768xbf16>
    %cst = arith.constant dense<0.000000e+00> : vector<2x768xf32>
    %9 = tpu.matmul %7, %8, %cst {dimension_numbers = #tpu.dot_dimension_numbers<[1], [0], [0], [1], [0, 0, 1, 1], [], []>} : vector<2x32xbf16>, vector<32x768xbf16>, vector<2x768xf32> -> vector<2x768xf32>
    %c0_5 = arith.constant 0 : index
    %c0_6 = arith.constant 0 : index
    %10 = vector.load %arg5[%c0_5, %c0_6] : memref<1x1408xf32, #tpu.memory_space<vmem>>, vector<1x768xf32>
    %11 = vector.broadcast %10 : vector<1x768xf32> to vector<2x768xf32>
    %12 = arith.addf %9, %11 : vector<2x768xf32>
    %13 = vector.extract_strided_slice %12 {offsets = [0, 0], sizes = [1, 80], strides = [1, 1]} : vector<2x768xf32> to vector<1x80xf32>
    %14 = vector.extract_strided_slice %12 {offsets = [0, 128], sizes = [1, 32], strides = [1, 1]} : vector<2x768xf32> to vector<1x32xf32>
    %15 = vector.extract_strided_slice %12 {offsets = [1, 256], sizes = [1, 80], strides = [1, 1]} : vector<2x768xf32> to vector<1x80xf32>
    %16 = vector.extract_strided_slice %12 {offsets = [1, 384], sizes = [1, 32], strides = [1, 1]} : vector<2x768xf32> to vector<1x32xf32>
    %17 = vector.extract_strided_slice %12 {offsets = [1, 512], sizes = [1, 32], strides = [1, 1]} : vector<2x768xf32> to vector<1x32xf32>
    %18 = vector.extract_strided_slice %12 {offsets = [1, 640], sizes = [1, 32], strides = [1, 1]} : vector<2x768xf32> to vector<1x32xf32>
    %19 = arith.addf %13, %15 : vector<1x80xf32>
    %cst_7 = arith.constant dense<0xFF800000> : vector<1xf32>
    %20 = vector.multi_reduction <maximumf>, %19, %cst_7 [1] : vector<1x80xf32> to vector<1xf32>
    %21 = vector.shape_cast %20 : vector<1xf32> to vector<1x1xf32>
    %22 = vector.broadcast %21 : vector<1x1xf32> to vector<1x80xf32>
    %23 = arith.subf %19, %22 : vector<1x80xf32>
    %24 = math.exp %23 : vector<1x80xf32>
    %cst_8 = arith.constant dense<0.000000e+00> : vector<1xf32>
    %25 = vector.multi_reduction <add>, %24, %cst_8 [1] : vector<1x80xf32> to vector<1xf32>
    %26 = vector.shape_cast %25 : vector<1xf32> to vector<1x1xf32>
    %27 = vector.broadcast %26 : vector<1x1xf32> to vector<1x80xf32>
    %28 = arith.divf %24, %27 : vector<1x80xf32>
    %29 = arith.truncf %28 : vector<1x80xf32> to vector<1x80xbf16>
    %c0_9 = arith.constant 0 : index
    %c0_10 = arith.constant 0 : index
    %30 = vector.load %arg3[%c0_9, %c0_10] : memref<80x32xbf16, #tpu.memory_space<vmem>>, vector<80x32xbf16>
    %cst_11 = arith.constant dense<0.000000e+00> : vector<1x32xf32>
    %31 = tpu.matmul %29, %30, %cst_11 {dimension_numbers = #tpu.dot_dimension_numbers<[1], [0], [0], [1], [0, 0, 1, 1], [], []>} : vector<1x80xbf16>, vector<80x32xbf16>, vector<1x32xf32> -> vector<1x32xf32>
    %32 = arith.truncf %31 : vector<1x32xf32> to vector<1x32xbf16>
    %c0_12 = arith.constant 0 : index
    %c1152 = arith.constant 1152 : index
    %33 = vector.load %arg4[%c0_12, %c1152] : memref<32x1408xbf16, #tpu.memory_space<vmem>>, vector<32x128xbf16>
    %cst_13 = arith.constant dense<0.000000e+00> : vector<1x128xf32>
    %34 = tpu.matmul %32, %33, %cst_13 {dimension_numbers = #tpu.dot_dimension_numbers<[1], [0], [0], [1], [0, 0, 1, 1], [], []>} : vector<1x32xbf16>, vector<32x128xbf16>, vector<1x128xf32> -> vector<1x128xf32>
    %35 = vector.extract_strided_slice %34 {offsets = [0, 0], sizes = [1, 32], strides = [1, 1]} : vector<1x128xf32> to vector<1x32xf32>
    %36 = arith.addf %14, %35 : vector<1x32xf32>
    %cst_14 = arith.constant 0.000000e+00 : f32
    %37 = vector.broadcast %cst_14 : f32 to vector<1x32xf32>
    %38 = arith.maximumf %36, %37 : vector<1x32xf32>
    %39 = arith.truncf %38 : vector<1x32xf32> to vector<1x32xbf16>
    %c0_15 = arith.constant 0 : index
    %c768 = arith.constant 768 : index
    %40 = vector.load %arg4[%c0_15, %c768] : memref<32x1408xbf16, #tpu.memory_space<vmem>>, vector<32x384xbf16>
    %cst_16 = arith.constant dense<0.000000e+00> : vector<1x384xf32>
    %41 = tpu.matmul %39, %40, %cst_16 {dimension_numbers = #tpu.dot_dimension_numbers<[1], [0], [0], [1], [0, 0, 1, 1], [], []>} : vector<1x32xbf16>, vector<32x384xbf16>, vector<1x384xf32> -> vector<1x384xf32>
    %c0_17 = arith.constant 0 : index
    %c768_18 = arith.constant 768 : index
    %42 = vector.load %arg5[%c0_17, %c768_18] : memref<1x1408xf32, #tpu.memory_space<vmem>>, vector<1x384xf32>
    %43 = arith.addf %41, %42 : vector<1x384xf32>
    %44 = vector.extract_strided_slice %43 {offsets = [0, 0], sizes = [1, 32], strides = [1, 1]} : vector<1x384xf32> to vector<1x32xf32>
    %45 = vector.extract_strided_slice %43 {offsets = [0, 128], sizes = [1, 32], strides = [1, 1]} : vector<1x384xf32> to vector<1x32xf32>
    %46 = vector.extract_strided_slice %43 {offsets = [0, 256], sizes = [1, 32], strides = [1, 1]} : vector<1x384xf32> to vector<1x32xf32>
    %47 = arith.addf %44, %16 : vector<1x32xf32>
    %48 = arith.negf %47 : vector<1x32xf32>
    %49 = math.exp %48 : vector<1x32xf32>
    %cst_19 = arith.constant 1.000000e+00 : f32
    %50 = vector.broadcast %cst_19 : f32 to vector<1x32xf32>
    %51 = arith.addf %50, %49 : vector<1x32xf32>
    %52 = arith.divf %50, %51 : vector<1x32xf32>
    %53 = arith.addf %45, %17 : vector<1x32xf32>
    %54 = arith.negf %53 : vector<1x32xf32>
    %55 = math.exp %54 : vector<1x32xf32>
    %cst_20 = arith.constant 1.000000e+00 : f32
    %56 = vector.broadcast %cst_20 : f32 to vector<1x32xf32>
    %57 = arith.addf %56, %55 : vector<1x32xf32>
    %58 = arith.divf %56, %57 : vector<1x32xf32>
    %59 = arith.mulf %52, %18 : vector<1x32xf32>
    %60 = arith.addf %46, %59 : vector<1x32xf32>
    %61 = math.tanh %60 : vector<1x32xf32>
    %cst_21 = arith.constant 1.000000e+00 : f32
    %62 = vector.broadcast %cst_21 : f32 to vector<1x32xf32>
    %63 = arith.subf %62, %58 : vector<1x32xf32>
    %64 = arith.mulf %63, %61 : vector<1x32xf32>
    %65 = arith.mulf %58, %5 : vector<1x32xf32>
    %66 = arith.addf %64, %65 : vector<1x32xf32>
    %c0_22 = arith.constant 0 : index
    %c0_23 = arith.constant 0 : index
    %67 = vector.load %arg7[%c0_22, %c0_23] : memref<1x32xf32, #tpu.memory_space<vmem>>, vector<1x32xf32>
    tpu.vector_store %arg7[%c0_22, %c0_23], %66 {strides = array<i32>} : memref<1x32xf32, #tpu.memory_space<vmem>>, vector<1x32xf32>,
    %68 = arith.truncf %66 : vector<1x32xf32> to vector<1x32xbf16>
    %c0_24 = arith.constant 0 : index
    %c1280 = arith.constant 1280 : index
    %69 = vector.load %arg4[%c0_24, %c1280] : memref<32x1408xbf16, #tpu.memory_space<vmem>>, vector<32x128xbf16>
    %cst_25 = arith.constant dense<0.000000e+00> : vector<1x128xf32>
    %70 = tpu.matmul %68, %69, %cst_25 {dimension_numbers = #tpu.dot_dimension_numbers<[1], [0], [0], [1], [0, 0, 1, 1], [], []>} : vector<1x32xbf16>, vector<32x128xbf16>, vector<1x128xf32> -> vector<1x128xf32>
    %c0_26 = arith.constant 0 : index
    %c1280_27 = arith.constant 1280 : index
    %71 = vector.load %arg5[%c0_26, %c1280_27] : memref<1x1408xf32, #tpu.memory_space<vmem>>, vector<1x128xf32>
    %72 = arith.addf %70, %71 : vector<1x128xf32>
    %73 = vector.extract_strided_slice %72 {offsets = [0, 0], sizes = [1, 40], strides = [1, 1]} : vector<1x128xf32> to vector<1x40xf32>
    %cst_28 = arith.constant dense<0xFF800000> : vector<1xf32>
    %74 = vector.multi_reduction <maximumf>, %73, %cst_28 [1] : vector<1x40xf32> to vector<1xf32>
    %75 = vector.shape_cast %74 : vector<1xf32> to vector<1x1xf32>
    %76 = vector.broadcast %75 : vector<1x1xf32> to vector<1x40xf32>
    %77 = arith.subf %73, %76 : vector<1x40xf32>
    %78 = math.exp %77 : vector<1x40xf32>
    %cst_29 = arith.constant dense<0.000000e+00> : vector<1xf32>
    %79 = vector.multi_reduction <add>, %78, %cst_29 [1] : vector<1x40xf32> to vector<1xf32>
    %80 = vector.shape_cast %79 : vector<1xf32> to vector<1x1xf32>
    %81 = math.log %80 : vector<1x1xf32>
    %82 = vector.broadcast %81 : vector<1x1xf32> to vector<1x40xf32>
    %83 = arith.subf %77, %82 : vector<1x40xf32>
    %cst_30 = arith.constant 0.000000e+00 : f32
    %84 = vector.broadcast %cst_30 : f32 to vector<1x88xf32>
    %cst_31 = arith.constant 0.000000e+00 : f32
    %85 = vector.broadcast %cst_31 : f32 to vector<1x96xf32>
    %cst_32 = arith.constant 0.000000e+00 : f32
    %86 = vector.broadcast %cst_32 : f32 to vector<1x48xf32>
    %87 = tpu.concatenate %83, %84, %66, %85, %28, %86 in 1 : vector<1x40xf32>, vector<1x88xf32>, vector<1x32xf32>, vector<1x96xf32>, vector<1x80xf32>, vector<1x48xf32> -> vector<1x384xf32>
    %88 = arith.index_cast %arg0 : i32 to index
    %c0_33 = arith.constant 0 : index
    %89 = vector.load %arg6[%88, %c0_33] : memref<6x384xf32, #tpu.memory_space<vmem>>, vector<1x384xf32>
    tpu.vector_store %arg6[%88, %c0_33], %87 {strides = array<i32>} : memref<6x384xf32, #tpu.memory_space<vmem>>, vector<1x384xf32>,
    return
  }
  func.func @transform_0(%arg0: i32) -> (i32, i32) {
    %c0_i32 = arith.constant 0 : i32
    %c0_i32_0 = arith.constant 0 : i32
    %c0_i32_1 = arith.constant 0 : i32
    return %c0_i32, %c0_i32_0 : i32, i32
  }
  func.func @transform_1(%arg0: i32) -> (i32, i32) {
    %c0_i32 = arith.constant 0 : i32
    %c0_i32_0 = arith.constant 0 : i32
    %c0_i32_1 = arith.constant 0 : i32
    return %c0_i32, %c0_i32_0 : i32, i32
  }
  func.func @transform_2(%arg0: i32) -> (i32, i32) {
    %c0_i32 = arith.constant 0 : i32
    %c0_i32_0 = arith.constant 0 : i32
    %c0_i32_1 = arith.constant 0 : i32
    return %c0_i32, %c0_i32_0 : i32, i32
  }
  func.func @transform_3(%arg0: i32) -> (i32, i32) {
    %c0_i32 = arith.constant 0 : i32
    %c0_i32_0 = arith.constant 0 : i32
    %c0_i32_1 = arith.constant 0 : i32
    return %c0_i32, %c0_i32_0 : i32, i32
  }
  func.func @transform_4(%arg0: i32) -> (i32, i32) {
    %c0_i32 = arith.constant 0 : i32
    %c0_i32_0 = arith.constant 0 : i32
    %c0_i32_1 = arith.constant 0 : i32
    return %c0_i32, %c0_i32_0 : i32, i32
  }
  func.func @transform_5(%arg0: i32) -> (i32, i32) {
    %c0_i32 = arith.constant 0 : i32
    %c0_i32_0 = arith.constant 0 : i32
    %c0_i32_1 = arith.constant 0 : i32
    return %c0_i32, %c0_i32_0 : i32, i32
  }
}

</mosaic_0001>

<llo_original>
// kernel: tpu_custom_call.1
$region0: #{tpu_custom_call.1}
  #allocation0 [shape = 'u32[]', space=smem, size = 0x4, offset = 0x4, fixed_abs, tag = 'smem constant byte address 0x4 - core index']
  #allocation1 [shape = 'u32[144,128]{1,0:T(1,128)}', space=vmem, size = 0x12000, scoped, tag = 'internal scratch']
  #allocation2 [shape = 'f32[1,32]{1,0:T(1,128)}', space=vmem, size = 0x200, scoped, tag = 'scratch operand']
  %s0 = inlined_call_operand.vmem [shape: f32[6,32], index: 0, kind: input, shape index: {}]
  %s1 = inlined_call_operand.vmem [shape: f32[1,32], index: 1, kind: input, shape index: {}]
  %s2 = inlined_call_operand.vmem [shape: bf16[80,32], index: 2, kind: input, shape index: {}]
  %s3 = inlined_call_operand.hbm [shape: bf16[32,1408], index: 3, kind: input, shape index: {}]
  %s4 = inlined_call_operand.vmem [shape: f32[1,1408], index: 4, kind: input, shape index: {}]
  %s5 = inlined_call_operand.hbm [shape: f32[6,384], index: 5, kind: output, shape index: {}]
  %s6 = sld [smem:[#allocation0]]
  $region61: #{tpu_custom_call.1} parent=0
    _
  %s8 = ssub.s32 1, %s6
  %s9 = scalar_select 0, %s8, %s6
  $region1: #{tpu_custom_call.1} parent=0
    #allocation3 [shape = 'u8[90112]{0}', space=vmem, size = 0x16000, scoped, tag = 'input window, operand 3, single buffered']
    #allocation4 [shape = 's32[2]{0}', space=sflag, size = 0x8, scoped, tag = 'scoped memory for tpu_custom_call.1']
    #allocation5 [shape = 's32[2]{0}', space=sflag, size = 0x8, scoped, tag = 'scoped memory for tpu_custom_call.1']
    #allocation6 [shape = 'u8[12288]{0}', space=vmem, size = 0x3000, scoped, tag = 'output window, operand 0, single buffered']
    %10 = vsyncpa [#allocation4], 0
    %11 = vsyncpa [#allocation5], 0
    loop: start=0, step=1, limit=8
    $region2: #{tpu_custom_call.1} parent=1 // loop_pre_header
      _
    $region3: #{tpu_custom_call.1} parent=1 // loop_header
      %s13 = sphi 0, %s17
      %p14 = scmp.ge.s32.totalorder %s13, 8
      %s21 = sphi 0, %s21
      %s23 = sphi 0, %s21
      %s24 = sphi 0, %s23
      %s38 = sphi 0, %s24
      %s42 = sphi 0, %s42
      %s44 = sphi 0, %s42
      %s45 = sphi 0, %s44
      %s59 = sphi 0, %s45
      %s63 = sphi 0, %s63
      %s65 = sphi 0, %s63
      %s66 = sphi 0, %s65
      %s80 = sphi 0, %s66
      %s84 = sphi 0, %s84
      %s86 = sphi 0, %s84
      %s87 = sphi 0, %s86
      %s101 = sphi 0, %s87
      %s105 = sphi 0, %s105
      %s107 = sphi 0, %s105
      %s108 = sphi 0, %s107
      %s122 = sphi 0, %s108
      %s126 = sphi 0, %s126
      %s128 = sphi 0, %s126
      %s129 = sphi 0, %s128
      %s143 = sphi 0, %s129
    $region4: #{tpu_custom_call.1} parent=1 // loop_header_branch
      %16 = sbr.rel (%p14) target = $region8
    $region5: #{tpu_custom_call.1} parent=1 // loop_body
      %s18 = ssub.s32 %s13, 1
      %s19 = ssub.s32 %s13, 2
      %s20 = sadd.s32 %s13, 1
      %s22 = sadd.s32 %s21, 1
      %p25 = scmp.eq.s32.totalorder %s13, 5
      %p26 = scmp.ne.s32.totalorder %s21, %s23
      %p27 = scmp.eq.s32.totalorder %s13, 0
      %p28 = por %p26, %p27
      %p29 = scmp.ne.s32.totalorder %s21, %s23
      %p30 = scmp.eq.s32.totalorder %s18, 5
      %p31 = por %p29, %p30
      %p32 = scmp.ne.s32.totalorder %s23, %s24
      %p33 = scmp.eq.s32.totalorder %s18, 0
      %p34 = por %p32, %p33
      %p35 = scmp.ne.s32.totalorder %s23, %s24
      %p36 = scmp.eq.s32.totalorder %s19, 5
      %p37 = por %p35, %p36
      %p39 = scmp.ne.s32.totalorder %s24, %s38
      %p40 = scmp.eq.s32.totalorder %s19, 0
      %p41 = por %p39, %p40
      %s43 = sadd.s32 %s42, 1
      %p46 = scmp.eq.s32.totalorder %s13, 5
      %p47 = scmp.ne.s32.totalorder %s42, %s44
      %p48 = scmp.eq.s32.totalorder %s13, 0
      %p49 = por %p47, %p48
      %p50 = scmp.ne.s32.totalorder %s42, %s44
      %p51 = scmp.eq.s32.totalorder %s18, 5
      %p52 = por %p50, %p51
      %p53 = scmp.ne.s32.totalorder %s44, %s45
      %p54 = scmp.eq.s32.totalorder %s18, 0
      %p55 = por %p53, %p54
      %p56 = scmp.ne.s32.totalorder %s44, %s45
      %p57 = scmp.eq.s32.totalorder %s19, 5
      %p58 = por %p56, %p57
      %p60 = scmp.ne.s32.totalorder %s45, %s59
      %p61 = scmp.eq.s32.totalorder %s19, 0
      %p62 = por %p60, %p61
      %s64 = sadd.s32 %s63, 1
      %p67 = scmp.eq.s32.totalorder %s13, 5
      %p68 = scmp.ne.s32.totalorder %s63, %s65
      %p69 = scmp.eq.s32.totalorder %s13, 0
      %p70 = por %p68, %p69
      %p71 = scmp.ne.s32.totalorder %s63, %s65
      %p72 = scmp.eq.s32.totalorder %s18, 5
      %p73 = por %p71, %p72
      %p74 = scmp.ne.s32.totalorder %s65, %s66
      %p75 = scmp.eq.s32.totalorder %s18, 0
      %p76 = por %p74, %p75
      %p77 = scmp.ne.s32.totalorder %s65, %s66
      %p78 = scmp.eq.s32.totalorder %s19, 5
      %p79 = por %p77, %p78
      %p81 = scmp.ne.s32.totalorder %s66, %s80
      %p82 = scmp.eq.s32.totalorder %s19, 0
      %p83 = por %p81, %p82
      %s85 = sadd.s32 %s84, 1
      %p88 = scmp.eq.s32.totalorder %s13, 5
      %p89 = scmp.ne.s32.totalorder %s84, %s86
      %p90 = scmp.eq.s32.totalorder %s13, 0
      %p91 = por %p89, %p90
      %p92 = scmp.ne.s32.totalorder %s84, %s86
      %p93 = scmp.eq.s32.totalorder %s18, 5
      %p94 = por %p92, %p93
      %p95 = scmp.ne.s32.totalorder %s86, %s87
      %p96 = scmp.eq.s32.totalorder %s18, 0
      %p97 = por %p95, %p96
      %p98 = scmp.ne.s32.totalorder %s86, %s87
      %p99 = scmp.eq.s32.totalorder %s19, 5
      %p100 = por %p98, %p99
      %p102 = scmp.ne.s32.totalorder %s87, %s101
      %p103 = scmp.eq.s32.totalorder %s19, 0
      %p104 = por %p102, %p103
      %s106 = sadd.s32 %s105, 1
      %p109 = scmp.eq.s32.totalorder %s13, 5
      %p110 = scmp.ne.s32.totalorder %s105, %s107
      %p111 = scmp.eq.s32.totalorder %s13, 0
      %p112 = por %p110, %p111
      %p113 = scmp.ne.s32.totalorder %s105, %s107
      %p114 = scmp.eq.s32.totalorder %s18, 5
      %p115 = por %p113, %p114
      %p116 = scmp.ne.s32.totalorder %s107, %s108
      %p117 = scmp.eq.s32.totalorder %s18, 0
      %p118 = por %p116, %p117
      %p119 = scmp.ne.s32.totalorder %s107, %s108
      %p120 = scmp.eq.s32.totalorder %s19, 5
      %p121 = por %p119, %p120
      %p123 = scmp.ne.s32.totalorder %s108, %s122
      %p124 = scmp.eq.s32.totalorder %s19, 0
      %p125 = por %p123, %p124
      %s127 = sadd.s32 %s126, 1
      %p130 = scmp.eq.s32.totalorder %s13, 5
      %p131 = scmp.ne.s32.totalorder %s126, %s128
      %p132 = scmp.eq.s32.totalorder %s13, 0
      %p133 = por %p131, %p132
      %p134 = scmp.ne.s32.totalorder %s126, %s128
      %p135 = scmp.eq.s32.totalorder %s18, 5
      %p136 = por %p134, %p135
      %p137 = scmp.ne.s32.totalorder %s128, %s129
      %p138 = scmp.eq.s32.totalorder %s18, 0
      %p139 = por %p137, %p138
      %p140 = scmp.ne.s32.totalorder %s128, %s129
      %p141 = scmp.eq.s32.totalorder %s19, 5
      %p142 = por %p140, %p141
      %p144 = scmp.ne.s32.totalorder %s129, %s143
      %p145 = scmp.eq.s32.totalorder %s19, 0
      %p146 = por %p144, %p145
      %p147 = scmp.le.s32.totalorder 1, %s13
      %p148 = scmp.lt.s32.totalorder %s13, 7
      %p149 = pnand %p147, %p148
      %p150 = pneg %p149
      // Predicated region
      $region9: #{tpu_custom_call.1} parent=5 // pred_check
        _
      $region10: #{tpu_custom_call.1} parent=5 // pred_check_branch
        %152 = sbr.rel (%p149) target = $region12
      $region11: #{tpu_custom_call.1} parent=5 // pred_region
        %s153 = ssub.s32 %s13, 1
        // Predicated region
        $region13: #{tpu_custom_call.1} parent=11 // pred_check
          %p154 = pneg %p34
        $region14: #{tpu_custom_call.1} parent=11 // pred_check_branch
          %156 = sbr.rel (%p154) target = $region16
        $region15: #{tpu_custom_call.1} parent=11 // pred_region
          _
        $region16: #{tpu_custom_call.1} parent=11 // pred_fallthru
          _
        // Predicated region
        $region17: #{tpu_custom_call.1} parent=11 // pred_check
          %p157 = pneg %p55
        $region18: #{tpu_custom_call.1} parent=11 // pred_check_branch
          %159 = sbr.rel (%p157) target = $region20
        $region19: #{tpu_custom_call.1} parent=11 // pred_region
          _
        $region20: #{tpu_custom_call.1} parent=11 // pred_fallthru
          _
        // Predicated region
        $region21: #{tpu_custom_call.1} parent=11 // pred_check
          %p160 = pneg %p76
        $region22: #{tpu_custom_call.1} parent=11 // pred_check_branch
          %162 = sbr.rel (%p160) target = $region24
        $region23: #{tpu_custom_call.1} parent=11 // pred_region
          _
        $region24: #{tpu_custom_call.1} parent=11 // pred_fallthru
          _
        // Predicated region
        $region25: #{tpu_custom_call.1} parent=11 // pred_check
          %p163 = pneg %p97
        $region26: #{tpu_custom_call.1} parent=11 // pred_check_branch
          %165 = sbr.rel (%p163) target = $region28
        $region27: #{tpu_custom_call.1} parent=11 // pred_region
          %s167 = ssub.s32 2816, 2816
          %168 = vsyncadd [#allocation4], %s167
          %s169 = sshll.u32 [#allocation3], 4
          %s170 = int_to_ptr.vmem [resolvable:$true] %s169
          %175 = dma.hbm_to_vmem [thread:$0]  %s3, 2816, %s170, [#allocation4], 704, 704, 44
        $region28: #{tpu_custom_call.1} parent=11 // pred_fallthru
          _
        // Predicated region
        $region29: #{tpu_custom_call.1} parent=11 // pred_check
          %p176 = pneg %p118
        $region30: #{tpu_custom_call.1} parent=11 // pred_check_branch
          %178 = sbr.rel (%p176) target = $region32
        $region31: #{tpu_custom_call.1} parent=11 // pred_region
          _
        $region32: #{tpu_custom_call.1} parent=11 // pred_fallthru
          _
      $region12: #{tpu_custom_call.1} parent=5 // pred_fallthru
        _
      %p179 = scmp.lt.s32.totalorder %s13, 6
      // Predicated region
      $region33: #{tpu_custom_call.1} parent=5 // pred_check
        %p180 = pneg %p179
      $region34: #{tpu_custom_call.1} parent=5 // pred_check_branch
        %182 = sbr.rel (%p180) target = $region36
      $region35: #{tpu_custom_call.1} parent=5 // pred_region
        _
      $region36: #{tpu_custom_call.1} parent=5 // pred_fallthru
        _
      %p183 = scmp.le.s32.totalorder 1, %s13
      %p184 = scmp.lt.s32.totalorder %s13, 7
      %p185 = pnand %p183, %p184
      %p186 = pneg %p185
      // Predicated region
      $region37: #{tpu_custom_call.1} parent=5 // pred_check
        _
      $region38: #{tpu_custom_call.1} parent=5 // pred_check_branch
        %188 = sbr.rel (%p185) target = $region40
      $region39: #{tpu_custom_call.1} parent=5 // pred_region
        %s189 = ssub.s32 %s13, 1
        // Predicated region
        $region41: #{tpu_custom_call.1} parent=39 // pred_check
          %p190 = pneg %p97
        $region42: #{tpu_custom_call.1} parent=39 // pred_check_branch
          %192 = sbr.rel (%p190) target = $region44
        $region43: #{tpu_custom_call.1} parent=39 // pred_region
          %193 = dma.done [#allocation4], 2816
        $region44: #{tpu_custom_call.1} parent=39 // pred_fallthru
          _
        %p194 = pneg %p34
        %p195 = pneg %p31
        %p196 = pneg %p55
        %p197 = pneg %p52
        %p198 = pneg %p76
        %p199 = pneg %p73
        %p200 = pneg %p97
        %p201 = pneg %p94
        %p202 = pneg %p118
        %p203 = pneg %p115
        %p204 = pneg %p139
        %p205 = pneg %p136
        %p207 = scmp.eq.s32.totalorder %s18, 0
        // Predicated region
        $region45: #{tpu_custom_call.1} parent=39 // pred_check
          %p208 = pneg %p207
        $region46: #{tpu_custom_call.1} parent=39 // pred_check_branch
          %210 = sbr.rel (%p208) target = $region48
        $region47: #{tpu_custom_call.1} parent=39 // pred_region
          %v211 = vld [vmem:[%s1] sm:$0x1]
          %vm212 = vcmask 253952
          %213 = vst.msk [vmem:[#allocation2] sm:$0x1] %vm212, %v211
        $region48: #{tpu_custom_call.1} parent=39 // pred_fallthru
          _
        %s214 = scalar_lea.vmem %s0, %s18
        %v215 = vld [vmem:[%s214] sm:$0x1]
        %v216 = vld [vmem:[#allocation2] sm:$0x1]
        %v218 = vlaneseq
        %v219 = vshrl.u32 %v218, 7
        %v220 = vsub.s32 0, %v219
        %v221 = vrot.slane %v216, %v220
        %vm223 = vcmask 1040384
        %v224 = vsel %vm223, %v215, %v221
        %v225 = vpack.c.bf16 %v224, %v224
        %v226 = vld [vmem:[#allocation3] sm:$0xff]
        %v227 = vld [vmem:[#allocation3 + $0x8] sm:$0xff]
        %v228 = vld [vmem:[#allocation3 + $0x10] sm:$0xff]
        %v229 = vld [vmem:[#allocation3 + $0x2c] sm:$0xff]
        %v230 = vld [vmem:[#allocation3 + $0x34] sm:$0xff]
        %v231 = vld [vmem:[#allocation3 + $0x3c] sm:$0xff]
        %v232 = vld [vmem:[#allocation3 + $0x58] sm:$0xff]
        %v233 = vld [vmem:[#allocation3 + $0x60] sm:$0xff]
        %v234 = vld [vmem:[#allocation3 + $0x68] sm:$0xff]
        %v235 = vld [vmem:[#allocation3 + $0x84] sm:$0xff]
        %v236 = vld [vmem:[#allocation3 + $0x8c] sm:$0xff]
        %v237 = vld [vmem:[#allocation3 + $0x94] sm:$0xff]
        %v238 = vld [vmem:[%s4] sm:$0x3f]
        %v240 = vlaneseq
        %v241 = vshrl.u32 %v240, 7
        %v242 = vsub.s32 0, %v241
        %v243 = vrot.slane %v238, %v242
        %v244 = vlaneseq
        %v245 = vshrl.u32 %v244, 7
        %v246 = vsub.s32 1, %v245
        %v247 = vrot.slane %v238, %v246
        %v248 = vlaneseq
        %v249 = vshrl.u32 %v248, 7
        %v250 = vsub.s32 2, %v249
        %v251 = vrot.slane %v238, %v250
        %v252 = vlaneseq
        %v253 = vshrl.u32 %v252, 7
        %v254 = vsub.s32 3, %v253
        %v255 = vrot.slane %v238, %v254
        %v256 = vlaneseq
        %v257 = vshrl.u32 %v256, 7
        %v258 = vsub.s32 4, %v257
        %v259 = vrot.slane %v238, %v258
        %v260 = vlaneseq
        %v261 = vshrl.u32 %v260, 7
        %v262 = vsub.s32 5, %v261
        %v263 = vrot.slane %v238, %v262
        %v282 = vunpack.c.l.b16 %v226
        %v283 = vunpack.c.h.b16 %v226
        %v284 = vunpack.c.l.b16 %v227
        %v285 = vunpack.c.h.b16 %v227
        %v286 = vunpack.c.l.b16 %v228
        %v287 = vunpack.c.h.b16 %v228
        %v288 = vunpack.c.l.b16 %v229
        %v289 = vunpack.c.h.b16 %v229
        %v290 = vunpack.c.l.b16 %v230
        %v291 = vunpack.c.h.b16 %v230
        %v292 = vunpack.c.l.b16 %v231
        %v293 = vunpack.c.h.b16 %v231
        %v294 = vunpack.c.l.b16 %v232
        %v295 = vunpack.c.h.b16 %v232
        %v296 = vunpack.c.l.b16 %v233
        %v297 = vunpack.c.h.b16 %v233
        %v298 = vunpack.c.l.b16 %v234
        %v299 = vunpack.c.h.b16 %v234
        %v300 = vunpack.c.l.b16 %v235
        %v301 = vunpack.c.h.b16 %v235
        %v302 = vunpack.c.l.b16 %v236
        %v303 = vunpack.c.h.b16 %v236
        %v304 = vunpack.c.l.b16 %v237
        %v305 = vunpack.c.h.b16 %v237
        %v306 = vpack.c.b16 %v288, %v282
        %v307 = vpack.c.b16 %v289, %v283
        %v308 = vpack.c.b16 %v290, %v284
        %v309 = vpack.c.b16 %v291, %v285
        %v310 = vpack.c.b16 %v292, %v286
        %v311 = vpack.c.b16 %v293, %v287
        %v312 = vpack.c.b16 %v300, %v294
        %v313 = vpack.c.b16 %v301, %v295
        %v314 = vpack.c.b16 %v302, %v296
        %v315 = vpack.c.b16 %v303, %v297
        %v316 = vpack.c.b16 %v304, %v298
        %v317 = vpack.c.b16 %v305, %v299
        %vm330 = vcmask 261120
        %v332 = vsel %vm330, %v225, 0
        %334 = vmatprep.subr.bf16.mxu0 %v307
        %335 = vmatpush1.bf16.msra.mxu0 %v306
        %336 = vmatprep.subr.bf16.mxu0 %v313
        %337 = vmatpush1.bf16.msra.mxu0 %v312
        %338 = vmatprep.subr.bf16.mxu0 0
        %339 = vmatpush1.bf16.msra.mxu0 0
        %340 = vmatprep.subr.bf16.mxu0 0
        %341 = vmatpush1.bf16.msra.mxu0 0
        %342 = vmatprep.subr.bf16.mxu0 0
        %343 = vmatpush1.bf16.msra.mxu0 0
        %344 = vmatprep.subr.bf16.mxu0 0
        %345 = vmatpush1.bf16.msra.mxu0 0
        %346 = vmatprep.subr.bf16.mxu0 0
        %347 = vmatpush1.bf16.msra.mxu0 0
        %348 = vmatprep.subr.bf16.mxu0 0
        %349 = vmatpush1.bf16.msra.mxu0 0
        %350 = vmatprep.subr.bf16.mxu0 0
        %351 = vmatpush1.bf16.msra.mxu0 0
        %352 = vmatprep.subr.bf16.mxu0 0
        %353 = vmatpush1.bf16.msra.mxu0 0
        %354 = vmatprep.subr.bf16.mxu0 0
        %355 = vmatpush1.bf16.msra.mxu0 0
        %356 = vmatprep.subr.bf16.mxu0 0
        %357 = vmatpush1.bf16.msra.mxu0 0
        %358 = vmatprep.subr.bf16.mxu0 0
        %359 = vmatpush1.bf16.msra.mxu0 0
        %360 = vmatprep.subr.bf16.mxu0 0
        %361 = vmatpush1.bf16.msra.mxu0 0
        %362 = vmatprep.subr.bf16.mxu0 0
        %363 = vmatpush1.bf16.msra.mxu0 0
        %364 = vmatprep.subr.bf16.mxu0 0
        %365 = vmatpush1.bf16.msra.mxu0 0
        %366 = vmatprep.mubr.bf16.mxu0 0
        %367 = vmatmul.mubr.bf16.gmra.mrb[0].mxu0 %v332
        %v368 = vpop.f32.mrb[0].mxu0
        %v369 = vadd.f32 %v243, %v368
        %v370 = vpop.f32.mrb[0].mxu0
        %v371 = vadd.f32 %v247, %v370
        %v372 = vpop.f32.mrb[0].mxu0
        %v373 = vpop.f32.mrb[0].mxu0
        %374 = vdwg.mxu0
        %375 = vmatprep.subr.bf16.mxu0 %v309
        %376 = vmatpush1.bf16.msra.mxu0 %v308
        %377 = vmatprep.subr.bf16.mxu0 %v315
        %378 = vmatpush1.bf16.msra.mxu0 %v314
        %379 = vmatprep.subr.bf16.mxu0 0
        %380 = vmatpush1.bf16.msra.mxu0 0
        %381 = vmatprep.subr.bf16.mxu0 0
        %382 = vmatpush1.bf16.msra.mxu0 0
        %383 = vmatprep.subr.bf16.mxu0 0
        %384 = vmatpush1.bf16.msra.mxu0 0
        %385 = vmatprep.subr.bf16.mxu0 0
        %386 = vmatpush1.bf16.msra.mxu0 0
        %387 = vmatprep.subr.bf16.mxu0 0
        %388 = vmatpush1.bf16.msra.mxu0 0
        %389 = vmatprep.subr.bf16.mxu0 0
        %390 = vmatpush1.bf16.msra.mxu0 0
        %391 = vmatprep.subr.bf16.mxu0 0
        %392 = vmatpush1.bf16.msra.mxu0 0
        %393 = vmatprep.subr.bf16.mxu0 0
        %394 = vmatpush1.bf16.msra.mxu0 0
        %395 = vmatprep.subr.bf16.mxu0 0
        %396 = vmatpush1.bf16.msra.mxu0 0
        %397 = vmatprep.subr.bf16.mxu0 0
        %398 = vmatpush1.bf16.msra.mxu0 0
        %399 = vmatprep.subr.bf16.mxu0 0
        %400 = vmatpush1.bf16.msra.mxu0 0
        %401 = vmatprep.subr.bf16.mxu0 0
        %402 = vmatpush1.bf16.msra.mxu0 0
        %403 = vmatprep.subr.bf16.mxu0 0
        %404 = vmatpush1.bf16.msra.mxu0 0
        %405 = vmatprep.subr.bf16.mxu0 0
        %406 = vmatpush1.bf16.msra.mxu0 0
        %407 = vmatprep.mubr.bf16.mxu0 0
        %408 = vmatmul.mubr.bf16.gmra.mrb[0].mxu0 %v332
        %v409 = vpop.f32.mrb[0].mxu0
        %v410 = vadd.f32 %v251, %v409
        %v411 = vpop.f32.mrb[0].mxu0
        %v412 = vadd.f32 %v255, %v411
        %v413 = vpop.f32.mrb[0].mxu0
        %v414 = vpop.f32.mrb[0].mxu0
        %415 = vdwg.mxu0
        %416 = vmatprep.subr.bf16.mxu0 %v311
        %417 = vmatpush1.bf16.msra.mxu0 %v310
        %418 = vmatprep.subr.bf16.mxu0 %v317
        %419 = vmatpush1.bf16.msra.mxu0 %v316
        %420 = vmatprep.subr.bf16.mxu0 0
        %421 = vmatpush1.bf16.msra.mxu0 0
        %422 = vmatprep.subr.bf16.mxu0 0
        %423 = vmatpush1.bf16.msra.mxu0 0
        %424 = vmatprep.subr.bf16.mxu0 0
        %425 = vmatpush1.bf16.msra.mxu0 0
        %426 = vmatprep.subr.bf16.mxu0 0
        %427 = vmatpush1.bf16.msra.mxu0 0
        %428 = vmatprep.subr.bf16.mxu0 0
        %429 = vmatpush1.bf16.msra.mxu0 0
        %430 = vmatprep.subr.bf16.mxu0 0
        %431 = vmatpush1.bf16.msra.mxu0 0
        %432 = vmatprep.subr.bf16.mxu0 0
        %433 = vmatpush1.bf16.msra.mxu0 0
        %434 = vmatprep.subr.bf16.mxu0 0
        %435 = vmatpush1.bf16.msra.mxu0 0
        %436 = vmatprep.subr.bf16.mxu0 0
        %437 = vmatpush1.bf16.msra.mxu0 0
        %438 = vmatprep.subr.bf16.mxu0 0
        %439 = vmatpush1.bf16.msra.mxu0 0
        %440 = vmatprep.subr.bf16.mxu0 0
        %441 = vmatpush1.bf16.msra.mxu0 0
        %442 = vmatprep.subr.bf16.mxu0 0
        %443 = vmatpush1.bf16.msra.mxu0 0
        %444 = vmatprep.subr.bf16.mxu0 0
        %445 = vmatpush1.bf16.msra.mxu0 0
        %446 = vmatprep.subr.bf16.mxu0 0
        %447 = vmatpush1.bf16.msra.mxu0 0
        %448 = vmatprep.mubr.bf16.mxu0 0
        %449 = vmatmul.mubr.bf16.gmra.mrb[0].mxu0 %v332
        %v450 = vpop.f32.mrb[0].mxu0
        %v451 = vadd.f32 %v259, %v450
        %v452 = vpop.f32.mrb[0].mxu0
        %v453 = vadd.f32 %v263, %v452
        %v454 = vpop.f32.mrb[0].mxu0
        %v455 = vpop.f32.mrb[0].mxu0
        %456 = vdwg.mxu0
        %v458 = vrot.slane %v410, 1
        %v460 = vadd.f32 %v369, %v458
        %vm461 = vcmask 647168
        %v462 = vsel %vm461, %v460, -inf
        %463 = vmax.xlane.f32.xlu0 %v462
        %v464 = vpop.xlane.xlu0 %463
        %v465 = vsub.f32 %v460, %v464
        %v466 = vmul.f32 %v465, 1.442695
        %v467 = vpow.pop %v466
        %v468 = vsel %vm461, %v467, 0.0
        %469 = vadd.xlane.f32.xlu0 %v468
        %v470 = vpop.xlane.xlu0 %469
        %v471 = vrcp.pop %v470
        %v472 = vmul.f32 %v467, %v471
        %v473 = vpack.c.bf16 %v472, %v472
        %v474 = vld [vmem:[%s2] sm:$0xf]
        %v475 = vld [vmem:[%s2 + $0x4] sm:$0xf]
        %v476 = vld [vmem:[%s2 + $0x8] sm:$0xf]
        %v477 = vld [vmem:[%s2 + $0xc] sm:$0xf]
        %v478 = vld [vmem:[%s2 + $0x10] sm:$0xf]
        %v479 = vld [vmem:[%s2 + $0x14] sm:$0xf]
        %v480 = vld [vmem:[%s2 + $0x18] sm:$0xf]
        %v481 = vld [vmem:[%s2 + $0x1c] sm:$0xf]
        %v482 = vld [vmem:[%s2 + $0x20] sm:$0xf]
        %v483 = vld [vmem:[%s2 + $0x24] sm:$0xf]
        %v494 = vunpack.c.l.b16 %v474
        %v495 = vunpack.c.l.b16 %v475
        %v496 = vunpack.c.l.b16 %v476
        %v497 = vunpack.c.l.b16 %v477
        %v498 = vunpack.c.l.b16 %v478
        %v499 = vunpack.c.l.b16 %v479
        %v500 = vunpack.c.l.b16 %v480
        %v501 = vunpack.c.l.b16 %v481
        %v502 = vunpack.c.l.b16 %v482
        %v503 = vunpack.c.l.b16 %v483
        %v504 = vpack.c.b16 %v495, %v494
        %v505 = vpack.c.b16 %v497, %v496
        %v506 = vpack.c.b16 %v499, %v498
        %v507 = vpack.c.b16 %v501, %v500
        %v508 = vpack.c.b16 %v503, %v502
        %vm514 = vcmask 654336
        %v516 = vsel %vm514, %v473, 0
        %518 = vmatprep.subr.bf16.mxu0 0
        %519 = vmatpush1.bf16.msra.mxu0 %v504
        %520 = vmatprep.subr.bf16.mxu0 0
        %521 = vmatpush1.bf16.msra.mxu0 %v505
        %522 = vmatprep.subr.bf16.mxu0 0
        %523 = vmatpush1.bf16.msra.mxu0 %v506
        %524 = vmatprep.subr.bf16.mxu0 0
        %525 = vmatpush1.bf16.msra.mxu0 %v507
        %526 = vmatprep.subr.bf16.mxu0 0
        %527 = vmatpush1.bf16.msra.mxu0 %v508
        %528 = vmatprep.subr.bf16.mxu0 0
        %529 = vmatpush1.bf16.msra.mxu0 0
        %530 = vmatprep.subr.bf16.mxu0 0
        %531 = vmatpush1.bf16.msra.mxu0 0
        %532 = vmatprep.subr.bf16.mxu0 0
        %533 = vmatpush1.bf16.msra.mxu0 0
        %534 = vmatprep.subr.bf16.mxu0 0
        %535 = vmatpush1.bf16.msra.mxu0 0
        %536 = vmatprep.subr.bf16.mxu0 0
        %537 = vmatpush1.bf16.msra.mxu0 0
        %538 = vmatprep.subr.bf16.mxu0 0
        %539 = vmatpush1.bf16.msra.mxu0 0
        %540 = vmatprep.subr.bf16.mxu0 0
        %541 = vmatpush1.bf16.msra.mxu0 0
        %542 = vmatprep.subr.bf16.mxu0 0
        %543 = vmatpush1.bf16.msra.mxu0 0
        %544 = vmatprep.subr.bf16.mxu0 0
        %545 = vmatpush1.bf16.msra.mxu0 0
        %546 = vmatprep.subr.bf16.mxu0 0
        %547 = vmatpush1.bf16.msra.mxu0 0
        %548 = vmatprep.subr.bf16.mxu0 0
        %549 = vmatpush1.bf16.msra.mxu0 0
        %550 = vmatprep.mubr.bf16.mxu0 0
        %551 = vmatmul.mubr.bf16.gmra.mrb[0].mxu0 %v516
        %v552 = vpop.f32.mrb[0].mxu0
        %v553 = vadd.f32 0.0, %v552
        %v554 = vpop.f32.mrb[0].mxu0
        %v555 = vpop.f32.mrb[0].mxu0
        %v556 = vpop.f32.mrb[0].mxu0
        %557 = vdwg.mxu0
        %v558 = vpack.c.bf16 %v553, %v553
        %v559 = vld [vmem:[#allocation3 + $0x24] sm:$0xf]
        %v560 = vld [vmem:[#allocation3 + $0x50] sm:$0xf]
        %v561 = vld [vmem:[#allocation3 + $0x7c] sm:$0xf]
        %v562 = vld [vmem:[#allocation3 + $0xa8] sm:$0xf]
        %v567 = vunpack.c.l.b16 %v559
        %v568 = vunpack.c.l.b16 %v560
        %v569 = vunpack.c.l.b16 %v561
        %v570 = vunpack.c.l.b16 %v562
        %v571 = vpack.c.b16 %v568, %v567
        %v572 = vpack.c.b16 %v570, %v569
        %v576 = vsel %vm330, %v558, 0
        %578 = vmatprep.subr.bf16.mxu0 0
        %579 = vmatpush1.bf16.msra.mxu0 %v571
        %580 = vmatprep.subr.bf16.mxu0 0
        %581 = vmatpush1.bf16.msra.mxu0 %v572
        %582 = vmatprep.subr.bf16.mxu0 0
        %583 = vmatpush1.bf16.msra.mxu0 0
        %584 = vmatprep.subr.bf16.mxu0 0
        %585 = vmatpush1.bf16.msra.mxu0 0
        %586 = vmatprep.subr.bf16.mxu0 0
        %587 = vmatpush1.bf16.msra.mxu0 0
        %588 = vmatprep.subr.bf16.mxu0 0
        %589 = vmatpush1.bf16.msra.mxu0 0
        %590 = vmatprep.subr.bf16.mxu0 0
        %591 = vmatpush1.bf16.msra.mxu0 0
        %592 = vmatprep.subr.bf16.mxu0 0
        %593 = vmatpush1.bf16.msra.mxu0 0
        %594 = vmatprep.subr.bf16.mxu0 0
        %595 = vmatpush1.bf16.msra.mxu0 0
        %596 = vmatprep.subr.bf16.mxu0 0
        %597 = vmatpush1.bf16.msra.mxu0 0
        %598 = vmatprep.subr.bf16.mxu0 0
        %599 = vmatpush1.bf16.msra.mxu0 0
        %600 = vmatprep.subr.bf16.mxu0 0
        %601 = vmatpush1.bf16.msra.mxu0 0
        %602 = vmatprep.subr.bf16.mxu0 0
        %603 = vmatpush1.bf16.msra.mxu0 0
        %604 = vmatprep.subr.bf16.mxu0 0
        %605 = vmatpush1.bf16.msra.mxu0 0
        %606 = vmatprep.subr.bf16.mxu0 0
        %607 = vmatpush1.bf16.msra.mxu0 0
        %608 = vmatprep.subr.bf16.mxu0 0
        %609 = vmatpush1.bf16.msra.mxu0 0
        %610 = vmatprep.mubr.bf16.mxu0 0
        %611 = vmatmul.mubr.bf16.gmra.mrb[0].mxu0 %v576
        %v612 = vpop.f32.mrb[0].mxu0
        %v613 = vadd.f32 0.0, %v612
        %v614 = vpop.f32.mrb[0].mxu0
        %v615 = vpop.f32.mrb[0].mxu0
        %v616 = vpop.f32.mrb[0].mxu0
        %617 = vdwg.mxu0
        %v618 = vadd.f32 %v371, %v613
        %v619 = vmax.f32 %v618, 0.0
        %v620 = vpack.c.bf16 %v619, %v619
        %v621 = vld [vmem:[#allocation3 + $0x18] sm:$0xff]
        %v622 = vld [vmem:[#allocation3 + $0x20] sm:$0xf]
        %v623 = vld [vmem:[#allocation3 + $0x44] sm:$0xff]
        %v624 = vld [vmem:[#allocation3 + $0x4c] sm:$0xf]
        %v625 = vld [vmem:[#allocation3 + $0x70] sm:$0xff]
        %v626 = vld [vmem:[#allocation3 + $0x78] sm:$0xf]
        %v627 = vld [vmem:[#allocation3 + $0x9c] sm:$0xff]
        %v628 = vld [vmem:[#allocation3 + $0xa4] sm:$0xf]
        %v629 = vld [vmem:[%s4 + $0x6] sm:$0x7]
        %v638 = vunpack.c.l.b16 %v621
        %v639 = vunpack.c.h.b16 %v621
        %v640 = vunpack.c.l.b16 %v622
        %v641 = vunpack.c.l.b16 %v623
        %v642 = vunpack.c.h.b16 %v623
        %v643 = vunpack.c.l.b16 %v624
        %v644 = vunpack.c.l.b16 %v625
        %v645 = vunpack.c.h.b16 %v625
        %v646 = vunpack.c.l.b16 %v626
        %v647 = vunpack.c.l.b16 %v627
        %v648 = vunpack.c.h.b16 %v627
        %v649 = vunpack.c.l.b16 %v628
        %v650 = vpack.c.b16 %v641, %v638
        %v651 = vpack.c.b16 %v642, %v639
        %v652 = vpack.c.b16 %v643, %v640
        %v653 = vpack.c.b16 %v647, %v644
        %v654 = vpack.c.b16 %v648, %v645
        %v655 = vpack.c.b16 %v649, %v646
        %v663 = vlaneseq
        %v664 = vshrl.u32 %v663, 7
        %v665 = vsub.s32 0, %v664
        %v666 = vrot.slane %v629, %v665
        %v667 = vlaneseq
        %v668 = vshrl.u32 %v667, 7
        %v669 = vsub.s32 1, %v668
        %v670 = vrot.slane %v629, %v669
        %v671 = vlaneseq
        %v672 = vshrl.u32 %v671, 7
        %v673 = vsub.s32 2, %v672
        %v674 = vrot.slane %v629, %v673
        %v679 = vsel %vm330, %v620, 0
        %681 = vmatprep.subr.bf16.mxu0 %v651
        %682 = vmatpush1.bf16.msra.mxu0 %v650
        %683 = vmatprep.subr.bf16.mxu0 %v654
        %684 = vmatpush1.bf16.msra.mxu0 %v653
        %685 = vmatprep.subr.bf16.mxu0 0
        %686 = vmatpush1.bf16.msra.mxu0 0
        %687 = vmatprep.subr.bf16.mxu0 0
        %688 = vmatpush1.bf16.msra.mxu0 0
        %689 = vmatprep.subr.bf16.mxu0 0
        %690 = vmatpush1.bf16.msra.mxu0 0
        %691 = vmatprep.subr.bf16.mxu0 0
        %692 = vmatpush1.bf16.msra.mxu0 0
        %693 = vmatprep.subr.bf16.mxu0 0
        %694 = vmatpush1.bf16.msra.mxu0 0
        %695 = vmatprep.subr.bf16.mxu0 0
        %696 = vmatpush1.bf16.msra.mxu0 0
        %697 = vmatprep.subr.bf16.mxu0 0
        %698 = vmatpush1.bf16.msra.mxu0 0
        %699 = vmatprep.subr.bf16.mxu0 0
        %700 = vmatpush1.bf16.msra.mxu0 0
        %701 = vmatprep.subr.bf16.mxu0 0
        %702 = vmatpush1.bf16.msra.mxu0 0
        %703 = vmatprep.subr.bf16.mxu0 0
        %704 = vmatpush1.bf16.msra.mxu0 0
        %705 = vmatprep.subr.bf16.mxu0 0
        %706 = vmatpush1.bf16.msra.mxu0 0
        %707 = vmatprep.subr.bf16.mxu0 0
        %708 = vmatpush1.bf16.msra.mxu0 0
        %709 = vmatprep.subr.bf16.mxu0 0
        %710 = vmatpush1.bf16.msra.mxu0 0
        %711 = vmatprep.subr.bf16.mxu0 0
        %712 = vmatpush1.bf16.msra.mxu0 0
        %713 = vmatprep.mubr.bf16.mxu0 0
        %714 = vmatmul.mubr.bf16.gmra.mrb[0].mxu0 %v679
        %v715 = vpop.f32.mrb[0].mxu0
        %v716 = vadd.f32 %v666, %v715
        %v717 = vpop.f32.mrb[0].mxu0
        %v718 = vadd.f32 %v670, %v717
        %v719 = vpop.f32.mrb[0].mxu0
        %v720 = vpop.f32.mrb[0].mxu0
        %721 = vdwg.mxu0
        %722 = vmatprep.subr.bf16.mxu0 0
        %723 = vmatpush1.bf16.msra.mxu0 %v652
        %724 = vmatprep.subr.bf16.mxu0 0
        %725 = vmatpush1.bf16.msra.mxu0 %v655
        %726 = vmatprep.subr.bf16.mxu0 0
        %727 = vmatpush1.bf16.msra.mxu0 0
        %728 = vmatprep.subr.bf16.mxu0 0
        %729 = vmatpush1.bf16.msra.mxu0 0
        %730 = vmatprep.subr.bf16.mxu0 0
        %731 = vmatpush1.bf16.msra.mxu0 0
        %732 = vmatprep.subr.bf16.mxu0 0
        %733 = vmatpush1.bf16.msra.mxu0 0
        %734 = vmatprep.subr.bf16.mxu0 0
        %735 = vmatpush1.bf16.msra.mxu0 0
        %736 = vmatprep.subr.bf16.mxu0 0
        %737 = vmatpush1.bf16.msra.mxu0 0
        %738 = vmatprep.subr.bf16.mxu0 0
        %739 = vmatpush1.bf16.msra.mxu0 0
        %740 = vmatprep.subr.bf16.mxu0 0
        %741 = vmatpush1.bf16.msra.mxu0 0
        %742 = vmatprep.subr.bf16.mxu0 0
        %743 = vmatpush1.bf16.msra.mxu0 0
        %744 = vmatprep.subr.bf16.mxu0 0
        %745 = vmatpush1.bf16.msra.mxu0 0
        %746 = vmatprep.subr.bf16.mxu0 0
        %747 = vmatpush1.bf16.msra.mxu0 0
        %748 = vmatprep.subr.bf16.mxu0 0
        %749 = vmatpush1.bf16.msra.mxu0 0
        %750 = vmatprep.subr.bf16.mxu0 0
        %751 = vmatpush1.bf16.msra.mxu0 0
        %752 = vmatprep.subr.bf16.mxu0 0
        %753 = vmatpush1.bf16.msra.mxu0 0
        %754 = vmatprep.mubr.bf16.mxu0 0
        %755 = vmatmul.mubr.bf16.gmra.mrb[0].mxu0 %v679
        %v756 = vpop.f32.mrb[0].mxu0
        %v757 = vadd.f32 %v674, %v756
        %v758 = vpop.f32.mrb[0].mxu0
        %v759 = vpop.f32.mrb[0].mxu0
        %v760 = vpop.f32.mrb[0].mxu0
        %761 = vdwg.mxu0
        %v763 = vrot.slane %v412, 1
        %v765 = vadd.f32 %v716, %v763
        %v766 = vxor.u32 %v765, 2147483648
        %v767 = vmul.f32 %v766, 1.442695
        %v768 = vpow.pop %v767
        %v769 = vadd.f32 %v768, 1.0
        %v770 = vrcp.pop %v769
        %v771 = vmul.f32 1.0, %v770
        %v773 = vrot.slane %v451, 1
        %v775 = vadd.f32 %v718, %v773
        %v776 = vxor.u32 %v775, 2147483648
        %v777 = vmul.f32 %v776, 1.442695
        %v778 = vpow.pop %v777
        %v779 = vadd.f32 %v778, 1.0
        %v780 = vrcp.pop %v779
        %v781 = vmul.f32 1.0, %v780
        %v783 = vrot.slane %v453, 1
        %v785 = vmul.f32 %v771, %v783
        %v786 = vadd.f32 %v757, %v785
        %v787 = vtanh.pop %v786
        %v788 = vsub.f32 1.0, %v781
        %v789 = vmul.f32 %v788, %v787
        %v790 = vmul.f32 %v781, %v216
        %v791 = vadd.f32 %v789, %v790
        %vm792 = vcmask 253952
        %793 = vst.msk [vmem:[#allocation2] sm:$0x1] %vm792, %v791
        %v794 = vpack.c.bf16 %v791, %v791
        %v795 = vld [vmem:[#allocation3 + $0x28] sm:$0xf]
        %v796 = vld [vmem:[#allocation3 + $0x54] sm:$0xf]
        %v797 = vld [vmem:[#allocation3 + $0x80] sm:$0xf]
        %v798 = vld [vmem:[#allocation3 + $0xac] sm:$0xf]
        %v799 = vld [vmem:[%s4 + $0xa] sm:$0x1]
        %v804 = vunpack.c.l.b16 %v795
        %v805 = vunpack.c.l.b16 %v796
        %v806 = vunpack.c.l.b16 %v797
        %v807 = vunpack.c.l.b16 %v798
        %v808 = vpack.c.b16 %v805, %v804
        %v809 = vpack.c.b16 %v807, %v806
        %v813 = vsel %vm330, %v794, 0
        %815 = vmatprep.subr.bf16.mxu0 0
        %816 = vmatpush1.bf16.msra.mxu0 %v808
        %817 = vmatprep.subr.bf16.mxu0 0
        %818 = vmatpush1.bf16.msra.mxu0 %v809
        %819 = vmatprep.subr.bf16.mxu0 0
        %820 = vmatpush1.bf16.msra.mxu0 0
        %821 = vmatprep.subr.bf16.mxu0 0
        %822 = vmatpush1.bf16.msra.mxu0 0
        %823 = vmatprep.subr.bf16.mxu0 0
        %824 = vmatpush1.bf16.msra.mxu0 0
        %825 = vmatprep.subr.bf16.mxu0 0
        %826 = vmatpush1.bf16.msra.mxu0 0
        %827 = vmatprep.subr.bf16.mxu0 0
        %828 = vmatpush1.bf16.msra.mxu0 0
        %829 = vmatprep.subr.bf16.mxu0 0
        %830 = vmatpush1.bf16.msra.mxu0 0
        %831 = vmatprep.subr.bf16.mxu0 0
        %832 = vmatpush1.bf16.msra.mxu0 0
        %833 = vmatprep.subr.bf16.mxu0 0
        %834 = vmatpush1.bf16.msra.mxu0 0
        %835 = vmatprep.subr.bf16.mxu0 0
        %836 = vmatpush1.bf16.msra.mxu0 0
        %837 = vmatprep.subr.bf16.mxu0 0
        %838 = vmatpush1.bf16.msra.mxu0 0
        %839 = vmatprep.subr.bf16.mxu0 0
        %840 = vmatpush1.bf16.msra.mxu0 0
        %841 = vmatprep.subr.bf16.mxu0 0
        %842 = vmatpush1.bf16.msra.mxu0 0
        %843 = vmatprep.subr.bf16.mxu0 0
        %844 = vmatpush1.bf16.msra.mxu0 0
        %845 = vmatprep.subr.bf16.mxu0 0
        %846 = vmatpush1.bf16.msra.mxu0 0
        %847 = vmatprep.mubr.bf16.mxu0 0
        %848 = vmatmul.mubr.bf16.gmra.mrb[0].mxu0 %v813
        %v849 = vpop.f32.mrb[0].mxu0
        %v850 = vadd.f32 %v799, %v849
        %v851 = vpop.f32.mrb[0].mxu0
        %v852 = vpop.f32.mrb[0].mxu0
        %v853 = vpop.f32.mrb[0].mxu0
        %854 = vdwg.mxu0
        %vm855 = vcmask 319488
        %v856 = vsel %vm855, %v850, -inf
        %857 = vmax.xlane.f32.xlu0 %v856
        %v858 = vpop.xlane.xlu0 %857
        %v859 = vsub.f32 %v850, %v858
        %v860 = vmul.f32 %v859, 1.442695
        %v861 = vpow.pop %v860
        %v862 = vsel %vm855, %v861, 0.0
        %863 = vadd.xlane.f32.xlu0 %v862
        %v864 = vpop.xlane.xlu0 %863
        %v865 = vlog2.pop %v864
        %v866 = vmul.f32 %v865, 0.6931472
        %v867 = vsub.f32 %v859, %v866
        %vm868 = vcmask 326656
        %v869 = vsel %vm868, %v867, 0.0
        %v870 = vsel %vm330, %v791, 0.0
        %v871 = vsel %vm514, %v472, 0.0
        %v875 = vcombine.low %v869, %v870
        %v877 = vunpack.c.l.s4 1966171168
        %v878 = vunpack.c.0.s8 %v877
        %v879 = vlaneseq
        %v880 = vshrl.u32 %v879, 7
        %v881 = vsub.s32 %v878, %v880
        %v882 = vrot.slane %v875, %v881
        %v884 = vunpack.c.l.s4 1966171168
        %v885 = vunpack.c.0.s8 %v884
        %v886 = vlaneseq
        %v887 = vshrl.u32 %v886, 7
        %v888 = vsub.s32 %v885, %v887
        %v889 = vrot.slane %v871, %v888
        %v890 = vcombine.low %v882, %v889
        %v892 = vunpack.c.l.s4 1966171168
        %v893 = vunpack.c.0.s8 %v892
        %v894 = vlaneseq
        %v895 = vshrl.u32 %v894, 7
        %v896 = vsub.s32 %v893, %v895
        %v897 = vrot.slane %v890, %v896
        %v899 = vlaneseq
        %vm900 = vcmp.ge.s32.totalorder %v899, 0
        %vm901 = vcmp.lt.s32.totalorder %v899, 384
        %vm902 = vmand %vm900, %vm901
        %s903 = sshra.s32 %s18, 3
        %s904 = sand.u32 %s18, 7
        %s905 = sshra.s32 %s18, 3
        %s906 = sand.u32 %s18, 7
        %s907 = smul.u32 %s903, 3
        %s908 = smul.u32 %s907, 8
        %s909 = sadd.s32 %s908, %s906
        %s910 = scalar_lea.vmem [#allocation6], %s909
        %911 = vst.msk [vmem:[%s910] ss:$8 sm:$0x7] %vm902, %v897
        %912 = vst.msk [vmem:[%s910] ss:$8 sm:$0x0] %vm902, %v897
        // Predicated region
        $region49: #{tpu_custom_call.1} parent=39 // pred_check
          %p913 = pneg %p136
        $region50: #{tpu_custom_call.1} parent=39 // pred_check_branch
          %915 = sbr.rel (%p913) target = $region52
        $region51: #{tpu_custom_call.1} parent=39 // pred_region
          %s917 = ssub.s32 384, 384
          %918 = vsyncadd [#allocation5], %s917
          %s920 = sshll.u32 [#allocation6], 4
          %s921 = int_to_ptr.vmem [resolvable:$true] %s920
          %923 = dma.vmem_to_hbm [thread:$0]  %s921, 384, %s5, [#allocation5]
        $region52: #{tpu_custom_call.1} parent=39 // pred_fallthru
          _
        // Predicated region
        $region53: #{tpu_custom_call.1} parent=39 // pred_check
          %p924 = pneg %p136
        $region54: #{tpu_custom_call.1} parent=39 // pred_check_branch
          %926 = sbr.rel (%p924) target = $region56
        $region55: #{tpu_custom_call.1} parent=39 // pred_region
          %927 = dma.done [#allocation5], 384
        $region56: #{tpu_custom_call.1} parent=39 // pred_fallthru
          _
      $region40: #{tpu_custom_call.1} parent=5 // pred_fallthru
        _
      %p928 = scmp.le.s32.totalorder 2, %s13
      // Predicated region
      $region57: #{tpu_custom_call.1} parent=5 // pred_check
        %p929 = pneg %p928
      $region58: #{tpu_custom_call.1} parent=5 // pred_check_branch
        %931 = sbr.rel (%p929) target = $region60
      $region59: #{tpu_custom_call.1} parent=5 // pred_region
        %s932 = ssub.s32 %s13, 2
      $region60: #{tpu_custom_call.1} parent=5 // pred_fallthru
        _
    $region6: #{tpu_custom_call.1} parent=1 // loop_footer
      %s17 = sadd.s32 1, %s13
    $region7: #{tpu_custom_call.1} parent=1 // loop_footer_branch
      %12 = sbr.rel target = $region3
    $region8: #{tpu_custom_call.1} parent=1 // loop_exit
      _
    %933 = vsyncpa [#allocation4], 1
    %s934 = scalar_lea.sflag [#allocation4], 1
    %935 = vsyncpa %s934, 1
    %936 = vsyncpa [#allocation5], 1
    %s937 = scalar_lea.sflag [#allocation5], 1
    %938 = vsyncpa %s937, 1

</llo_original>
